<compile_context>
chip_gen: v7x
topology: tpu7x:2x2x1
jax: 0.10.0
libtpu: 0.0.40
codegen_flags: <defaults>
</compile_context>

<pallas_src>
import itertools

import numpy as np
import jax
import jax.numpy as jnp
from jax.experimental import pallas as pl
from jax.experimental.pallas import tpu as pltpu


def _ctc_greedy_kernel(x_ref, idx_ref):
    """Per-(batch, time-tile) argmax over the vocab (sublane) axis."""
    x = x_ref[0]                                 # (V, T_tile), native dtype, time on lanes
    v = x.shape[0]
    # argmax over vocab = first sublane index achieving the column max
    # (first-index tie-break, matching np/torch argmax).
    col_max = jnp.max(x, axis=0, keepdims=True)                       # (1, T_tile)
    v_iota = jax.lax.broadcasted_iota(jnp.int32, x.shape, 0)          # (V, T_tile)
    idx = jnp.min(jnp.where(x == col_max, v_iota, v), axis=0, keepdims=True)
    idx_ref[0] = idx.astype(jnp.int32)           # single lane-dense (1, T_tile) store


def _plan_tiles(T, V, in_dtype, budget_bytes=12 << 20):
    """Pick a time tile and an explicit VMEM limit.

    Footprint model: double-buffered input block (V_padded, t_tile) in the
    native dtype plus double-buffered int32 output block whose sublane dim
    pads 1 -> 8.  Budget of 12 MiB keeps us under v5e's 16 MiB scoped default
    and v7x's 32 MiB scoped / 64 MiB physical VMEM with headroom.
    """
    in_item = jnp.dtype(in_dtype).itemsize
    out_item = 4  # int32 idx

    def _pad_sublanes(n, item):
        mult = 8 * max(1, 4 // item)             # f32: 8, bf16: 16, int8: 32
        return -(-n // mult) * mult

    def footprint(t_tile):
        in_block = _pad_sublanes(V, in_item) * t_tile * in_item
        out_block = _pad_sublanes(1, out_item) * t_tile * out_item
        return 2 * in_block + 2 * out_block      # double-buffered in + out

    if footprint(T) <= budget_bytes:
        t_tile = T                               # single tile per batch row
    else:
        per_128 = footprint(128)
        t_tile = max(128, (budget_bytes // per_128) * 128)
        t_tile = min(t_tile, T)

    fp = footprint(t_tile)
    # Explicit limit: at least the scoped default everywhere, never above v7x
    # physical minus headroom.
    vmem_limit = int(min(max(fp + (4 << 20), 16 << 20), 56 << 20))
    return t_tile, vmem_limit


def ctc_greedy_decode_arrays(x, input_lengths, t_tile=None, time_minor=False):
    """Pallas hot path.

    Args:
      x: logits, (B, T, V) (PyTorch layout) or (B, V, T) if time_minor=True.
      input_lengths: (B,) int lengths.
    Returns:
      (idx, keep): per-time argmax (B, T) int32 and the unique_consecutive +
      length "keep" mask (B, T) int8.
    """
    if time_minor:
        x_vt = x
        B, V, T = x.shape
    else:
        B, T, V = x.shape
        # Layout plumbing only (native dtype, no upcast); disappears if the
        # producer already emits time-minor logits.
        x_vt = jnp.transpose(x, (0, 2, 1))        # (B, V, T)

    if t_tile is None:
        t_tile, vmem_limit = _plan_tiles(T, V, x_vt.dtype)
    else:
        _, vmem_limit = _plan_tiles(min(t_tile, T), V, x_vt.dtype)
        t_tile = min(t_tile, T)
    nt = pl.cdiv(T, t_tile)

    idx3 = pl.pallas_call(
        _ctc_greedy_kernel,
        out_shape=jax.ShapeDtypeStruct((B, 1, T), jnp.int32),
        grid=(B, nt),
        in_specs=[pl.BlockSpec((1, V, t_tile), lambda b, t: (b, 0, t))],
        out_specs=pl.BlockSpec((1, 1, t_tile), lambda b, t: (b, 0, t)),
        compiler_params=pltpu.CompilerParams(
            dimension_semantics=("parallel", "parallel"),
            vmem_limit_bytes=vmem_limit),
    )(x_vt)
    idx = idx3[:, 0, :]                           # (B, T) int32

    # unique_consecutive + length mask as a trivial XLA elementwise op:
    #   keep[t] = (t < length) and (idx[t] != idx[t-1]),  idx[-1] := -1.
    prev = jnp.concatenate(
        [jnp.full((B, 1), -1, idx.dtype), idx[:, :-1]], axis=1)
    t_iota = jnp.arange(T, dtype=jnp.int32)[None, :]
    lengths = input_lengths.astype(jnp.int32)[:, None]
    keep = jnp.logical_and(t_iota < lengths, idx != prev).astype(jnp.int8)
    return idx, keep


def ctc_greedy_decode(x, input_lengths, t_tile=None, time_minor=False):
    """Mirrors CTCGreedyCharacterDecoder.forward:
    returns (indices_list, uncollapsed_list) as Python lists of lists."""
    idx, keep = ctc_greedy_decode_arrays(x, input_lengths, t_tile, time_minor)
    jax.block_until_ready((idx, keep))
    idx_np = np.asarray(idx)
    keep_np = np.asarray(keep)
    lens_np = np.asarray(input_lengths)

    T = idx_np.shape[1]
    assert int(lens_np.max()) <= T, "input_lengths must not exceed the time dim"

    indices_list, uncollapsed_list = [], []
    for i in range(idx_np.shape[0]):
        L = int(lens_np[i])
        uncollapsed_list.append(idx_np[i, :L].tolist())
        indices_list.append(
            [int(v) for v, k in zip(idx_np[i, :L], keep_np[i, :L]) if k])
    # Ragged Python-list outputs (tolist / unique_consecutive) are host glue.
    return indices_list, uncollapsed_list


def _reference(x, input_lengths):
    x_np = np.asarray(x)
    lens_np = np.asarray(input_lengths)
    ref_indices, ref_uncollapsed = [], []
    for i in range(x_np.shape[0]):
        L = int(lens_np[i])
        a = np.argmax(x_np[i, :L, :], axis=-1).astype(np.int32).tolist()
        ref_uncollapsed.append(a)
        ref_indices.append([int(k) for k, _ in itertools.groupby(a)])
    return ref_indices, ref_uncollapsed


if __name__ == "__main__":
    key = jax.random.PRNGKey(0)
    k1, k2, k3 = jax.random.split(key, 3)

    # Test 1: spec-like small shapes (single time tile, length < T masking).
    B, T, V = 2, 16, 8
    x = jax.random.normal(k1, (B, T, V), dtype=jnp.float32)
    input_lengths = jnp.array([16, 11], dtype=jnp.int32)
    got = ctc_greedy_decode(x, input_lengths)
    ref = _reference(x, input_lengths)
    assert got[0] == ref[0], (got[0], ref[0])
    assert got[1] == ref[1], (got[1], ref[1])

    # Test 2: exercises the time-tiled (now time-parallel) path with many
    # consecutive duplicates spanning tile boundaries.
    B2, T2, V2 = 2, 256, 8
    labels = jax.random.randint(k2, (B2, T2), 0, 4)
    x2 = (jax.nn.one_hot(labels, V2, dtype=jnp.float32) * 4.0
          + 0.1 * jax.random.normal(k3, (B2, T2, V2), dtype=jnp.float32))
    input_lengths2 = jnp.array([256, 200], dtype=jnp.int32)
    got2 = ctc_greedy_decode(x2, input_lengths2, t_tile=128)
    ref2 = _reference(x2, input_lengths2)
    assert got2[0] == ref2[0], (got2[0], ref2[0])
    assert got2[1] == ref2[1], (got2[1], ref2[1])

    print("KERNEL_OK")
</pallas_src>

<mosaic_0001>
module attributes {stable_mosaic.version = 11 : i64} {
  func.func @_ctc_greedy_kernel(%arg0: i32, %arg1: i32, %arg2: memref<1x8x16xf32, #tpu.memory_space<vmem>>, %arg3: memref<1x1x16xi32, #tpu.memory_space<vmem>>) attributes {dimension_semantics = [#tpu.dimension_semantics<parallel>, #tpu.dimension_semantics<parallel>], iteration_bounds = array<i64: 2, 1>, scalar_prefetch = 0 : i64, scratch_operands = 0 : i64, tpu.core_type = #tpu.core_type<tc>, window_params = [{transform_indices = @transform_0, window_bounds = array<i64: 1, 8, 16>}, {transform_indices = @transform_1, window_bounds = array<i64: 1, 1, 16>}]} {
    %c0 = arith.constant 0 : index
    %c0_0 = arith.constant 0 : index
    %c0_1 = arith.constant 0 : index
    %0 = vector.load %arg2[%c0, %c0_0, %c0_1] : memref<1x8x16xf32, #tpu.memory_space<vmem>>, vector<1x8x16xf32>
    %1 = vector.shape_cast %0 : vector<1x8x16xf32> to vector<8x16xf32>
    %cst = arith.constant dense<0xFF800000> : vector<16xf32>
    %2 = vector.multi_reduction <maximumf>, %1, %cst [0] : vector<8x16xf32> to vector<16xf32>
    %3 = vector.shape_cast %2 : vector<16xf32> to vector<1x16xf32>
    %4 = tpu.iota {dimensions = array<i32: 0>} : vector<8x16xi32>
    %5 = vector.broadcast %3 : vector<1x16xf32> to vector<8x16xf32>
    %6 = arith.cmpf oeq, %1, %5 : vector<8x16xf32>
    %c8_i32 = arith.constant 8 : i32
    %7 = vector.broadcast %c8_i32 : i32 to vector<8x16xi32>
    %8 = arith.select %6, %4, %7 : vector<8x16xi1>, vector<8x16xi32>
    %cst_2 = arith.constant dense<2147483647> : vector<16xi32>
    %9 = vector.multi_reduction <minsi>, %8, %cst_2 [0] : vector<8x16xi32> to vector<16xi32>
    %10 = vector.shape_cast %9 : vector<16xi32> to vector<1x16xi32>
    %c0_3 = arith.constant 0 : index
    %c0_4 = arith.constant 0 : index
    %c0_5 = arith.constant 0 : index
    %11 = vector.load %arg3[%c0_3, %c0_4, %c0_5] : memref<1x1x16xi32, #tpu.memory_space<vmem>>, vector<1x1x16xi32>
    %12 = vector.shape_cast %11 : vector<1x1x16xi32> to vector<1x16xi32>
    %13 = vector.shape_cast %10 : vector<1x16xi32> to vector<1x1x16xi32>
    tpu.vector_store %arg3[%c0_3, %c0_4, %c0_5], %13 {strides = array<i32>} : memref<1x1x16xi32, #tpu.memory_space<vmem>>, vector<1x1x16xi32>,
    return
  }
  func.func @transform_0(%arg0: i32, %arg1: i32) -> (i32, i32, i32) {
    %c0_i32 = arith.constant 0 : i32
    %c0_i32_0 = arith.constant 0 : i32
    return %arg0, %c0_i32, %arg1 : i32, i32, i32
  }
  func.func @transform_1(%arg0: i32, %arg1: i32) -> (i32, i32, i32) {
    %c0_i32 = arith.constant 0 : i32
    %c0_i32_0 = arith.constant 0 : i32
    return %arg0, %c0_i32, %arg1 : i32, i32, i32
  }
}

</mosaic_0001>

<llo_original>
// kernel: tpu_custom_call.1
$region0: #{tpu_custom_call.1}
  #allocation0 [shape = 'u32[]', space=smem, size = 0x4, offset = 0x4, fixed_abs, tag = 'smem constant byte address 0x4 - core index']
  #allocation1 [shape = 'u32[144,128]{1,0:T(1,128)}', space=vmem, size = 0x12000, scoped, tag = 'internal scratch']
  %s0 = inlined_call_operand.hbm [shape: f32[2,8,16], index: 0, kind: input, shape index: {}]
  %s1 = inlined_call_operand.hbm [shape: s32[2,1,16], index: 1, kind: output, shape index: {}]
  %s2 = sld [smem:[#allocation0]]
  $region41: #{tpu_custom_call.1} parent=0
    _
  %s4 = ssub.s32 1, %s2
  %s5 = scalar_select 0, %s4, %s2
  $region1: #{tpu_custom_call.1} parent=0
    #allocation2 [shape = 'u8[8192]{0}', space=vmem, size = 0x2000, scoped, tag = 'input window, operand 0']
    #allocation3 [shape = 's32[2]{0}', space=sflag, size = 0x8, scoped, tag = 'scoped memory for tpu_custom_call.1']
    #allocation4 [shape = 's32[2]{0}', space=sflag, size = 0x8, scoped, tag = 'scoped memory for tpu_custom_call.1']
    #allocation5 [shape = 'u8[1024]{0}', space=vmem, size = 0x400, scoped, tag = 'output window, operand 0']
    %6 = vsyncpa [#allocation3], 0
    %s7 = scalar_lea.sflag [#allocation3], 1
    %8 = vsyncpa %s7, 0
    %9 = vsyncpa [#allocation4], 0
    %s10 = scalar_lea.sflag [#allocation4], 1
    %11 = vsyncpa %s10, 0
    loop: start=0, step=1, limit=4
    $region2: #{tpu_custom_call.1} parent=1 // loop_pre_header
      _
    $region3: #{tpu_custom_call.1} parent=1 // loop_header
      %s13 = sphi 0, %s17
      %p14 = scmp.ge.s32.totalorder %s13, 4
      %s20 = sphi 0, %s32
      %s21 = sphi 0, %s28
      %s22 = sphi 0, %s20
      %s23 = sphi 0, %s21
      %s24 = sphi 0, %s22
      %s25 = sphi 0, %s23
      %s37 = sphi 0, %s39
      %s40 = sphi 0, %s37
      %s41 = sphi 0, %s40
      %s57 = sphi 0, %s41
      %s65 = sphi 0, %s67
      %s68 = sphi 0, %s65
      %s69 = sphi 0, %s68
      %s85 = sphi 0, %s69
    $region4: #{tpu_custom_call.1} parent=1 // loop_header_branch
      %16 = sbr.rel (%p14) target = $region8
    $region5: #{tpu_custom_call.1} parent=1 // loop_body
      %s18 = ssub.s32 %s13, 1
      %s19 = ssub.s32 %s13, 2
      %s26 = sadd.s32 1, %s21
      %p27 = scmp.ge.s32.totalorder %s26, 1
      %s28 = scalar_select %p27, 0, %s26
      %s29 = sadd.s32 1, %s20
      %s30 = scalar_select %p27, %s29, %s20
      %p31 = scmp.ge.s32.totalorder %s30, 2
      %s32 = scalar_select %p31, 0, %s30
      %s33 = ssub.s32 %s20, %s32
      %s34 = ssub.s32 %s21, %s28
      %s35 = sor.u32 %s33, %s34
      %p36 = scmp.eq.s32.totalorder %s35, 0
      %s38 = sadd.s32 %s37, 1
      %s39 = scalar_select %p36, %s37, %s38
      %p42 = pneg %p36
      %p43 = scmp.eq.s32.totalorder %s13, 1
      %p44 = por %p42, %p43
      %p45 = scmp.ne.s32.totalorder %s37, %s40
      %p46 = scmp.eq.s32.totalorder %s13, 0
      %p47 = por %p45, %p46
      %p48 = scmp.ne.s32.totalorder %s37, %s40
      %p49 = scmp.eq.s32.totalorder %s18, 1
      %p50 = por %p48, %p49
      %p51 = scmp.ne.s32.totalorder %s40, %s41
      %p52 = scmp.eq.s32.totalorder %s18, 0
      %p53 = por %p51, %p52
      %p54 = scmp.ne.s32.totalorder %s40, %s41
      %p55 = scmp.eq.s32.totalorder %s19, 1
      %p56 = por %p54, %p55
      %p58 = scmp.ne.s32.totalorder %s41, %s57
      %p59 = scmp.eq.s32.totalorder %s19, 0
      %p60 = por %p58, %p59
      %s61 = ssub.s32 %s20, %s32
      %s62 = ssub.s32 %s21, %s28
      %s63 = sor.u32 %s61, %s62
      %p64 = scmp.eq.s32.totalorder %s63, 0
      %s66 = sadd.s32 %s65, 1
      %s67 = scalar_select %p64, %s65, %s66
      %p70 = pneg %p64
      %p71 = scmp.eq.s32.totalorder %s13, 1
      %p72 = por %p70, %p71
      %p73 = scmp.ne.s32.totalorder %s65, %s68
      %p74 = scmp.eq.s32.totalorder %s13, 0
      %p75 = por %p73, %p74
      %p76 = scmp.ne.s32.totalorder %s65, %s68
      %p77 = scmp.eq.s32.totalorder %s18, 1
      %p78 = por %p76, %p77
      %p79 = scmp.ne.s32.totalorder %s68, %s69
      %p80 = scmp.eq.s32.totalorder %s18, 0
      %p81 = por %p79, %p80
      %p82 = scmp.ne.s32.totalorder %s68, %s69
      %p83 = scmp.eq.s32.totalorder %s19, 1
      %p84 = por %p82, %p83
      %p86 = scmp.ne.s32.totalorder %s69, %s85
      %p87 = scmp.eq.s32.totalorder %s19, 0
      %p88 = por %p86, %p87
      %p89 = scmp.le.s32.totalorder 1, %s13
      %p90 = scmp.lt.s32.totalorder %s13, 3
      %p91 = pnand %p89, %p90
      %p92 = pneg %p91
      // Predicated region
      $region9: #{tpu_custom_call.1} parent=5 // pred_check
        _
      $region10: #{tpu_custom_call.1} parent=5 // pred_check_branch
        %94 = sbr.rel (%p91) target = $region12
      $region11: #{tpu_custom_call.1} parent=5 // pred_region
        %s95 = ssub.s32 %s13, 1
      $region12: #{tpu_custom_call.1} parent=5 // pred_fallthru
        _
      %p96 = scmp.lt.s32.totalorder %s13, 2
      // Predicated region
      $region13: #{tpu_custom_call.1} parent=5 // pred_check
        %p97 = pneg %p96
      $region14: #{tpu_custom_call.1} parent=5 // pred_check_branch
        %99 = sbr.rel (%p97) target = $region16
      $region15: #{tpu_custom_call.1} parent=5 // pred_region
        // Predicated region
        $region17: #{tpu_custom_call.1} parent=15 // pred_check
          %p100 = pneg %p47
        $region18: #{tpu_custom_call.1} parent=15 // pred_check_branch
          %102 = sbr.rel (%p100) target = $region20
        $region19: #{tpu_custom_call.1} parent=15 // pred_region
          %s103 = sand.u32 %s37, 1
          %s104 = scalar_lea.sflag [#allocation3], %s103
          %s105 = sand.u32 %s37, 1
          %s106 = smul.addr %s105, 8
          %s107 = scalar_lea.vmem [#allocation2], %s106
          %s109 = ssub.s32 128, 128
          %110 = vsyncadd %s104, %s109
          %s111 = sadd.s32 %s21, %s20
          %s112 = smul.addr %s111, 128
          %s113 = scalar_lea.hbm %s0, %s112
          %s115 = sshll.u32 %s107, 4
          %s116 = int_to_ptr.vmem [resolvable:$true] %s115
          %118 = dma.hbm_to_vmem [thread:$0]  %s113, 128, %s116, %s104
        $region20: #{tpu_custom_call.1} parent=15 // pred_fallthru
          _
      $region16: #{tpu_custom_call.1} parent=5 // pred_fallthru
        _
      %p119 = scmp.le.s32.totalorder 1, %s13
      %p120 = scmp.lt.s32.totalorder %s13, 3
      %p121 = pnand %p119, %p120
      %p122 = pneg %p121
      // Predicated region
      $region21: #{tpu_custom_call.1} parent=5 // pred_check
        _
      $region22: #{tpu_custom_call.1} parent=5 // pred_check_branch
        %124 = sbr.rel (%p121) target = $region24
      $region23: #{tpu_custom_call.1} parent=5 // pred_region
        %s125 = ssub.s32 %s13, 1
        %s126 = sand.u32 %s40, 1
        %s127 = scalar_lea.sflag [#allocation3], %s126
        %s128 = sand.u32 %s40, 1
        %s129 = smul.addr %s128, 8
        %s130 = scalar_lea.vmem [#allocation2], %s129
        // Predicated region
        $region25: #{tpu_custom_call.1} parent=23 // pred_check
          %p131 = pneg %p53
        $region26: #{tpu_custom_call.1} parent=23 // pred_check_branch
          %133 = sbr.rel (%p131) target = $region28
        $region27: #{tpu_custom_call.1} parent=23 // pred_region
          %134 = dma.done %s127, 128
        $region28: #{tpu_custom_call.1} parent=23 // pred_fallthru
          _
        %s135 = sand.u32 %s40, 1
        %s136 = scalar_lea.sflag [#allocation3], %s135
        %s137 = sand.u32 %s40, 1
        %s138 = smul.addr %s137, 8
        %s139 = scalar_lea.vmem [#allocation2], %s138
        %p140 = pneg %p53
        %p141 = pneg %p50
        %p142 = pneg %p81
        %p143 = pneg %p78
        %s144 = sand.u32 %s68, 1
        %s145 = scalar_lea.sflag [#allocation4], %s144
        %s146 = sand.u32 %s68, 1
        %s147 = scalar_lea.vmem [#allocation5], %s146
        %v148 = vld [vmem:[%s130] sm:$0xff]
        %vm149 = vcmask 130048
        %v150 = vsel %vm149, %v148, -inf
        %v151 = vrot.slane %v150, 4
        %v152 = vmax.f32 %v150, %v151
        %v153 = vrot.slane %v152, 2
        %v154 = vmax.f32 %v152, %v153
        %v155 = vrot.slane %v154, 1
        %v156 = vmax.f32 %v154, %v155
        %v157 = vlaneseq
        %v158 = vshrl.u32 %v157, 7
        %vm159 = vcmp.eq.f32.partialorder %v148, %v156
        %v160 = vsel %vm159, %v158, 8
        %v161 = vsel %vm149, %v160, 2147483647
        %v162 = vrot.slane %v161, 4
        %vm163 = vcmp.lt.s32.totalorder %v161, %v162
        %v164 = vsel %vm163, %v161, %v162
        %v165 = vrot.slane %v164, 2
        %vm166 = vcmp.lt.s32.totalorder %v164, %v165
        %v167 = vsel %vm166, %v164, %v165
        %v168 = vrot.slane %v167, 1
        %vm169 = vcmp.lt.s32.totalorder %v167, %v168
        %v170 = vsel %vm169, %v167, %v168
        %vm171 = vcmask 122880
        %172 = vst.msk [vmem:[%s147] sm:$0x1] %vm171, %v170
        %s173 = sand.u32 %s68, 1
        %s174 = scalar_lea.sflag [#allocation4], %s173
        %s175 = sand.u32 %s68, 1
        %s176 = scalar_lea.vmem [#allocation5], %s175
        // Predicated region
        $region29: #{tpu_custom_call.1} parent=23 // pred_check
          %p177 = pneg %p78
        $region30: #{tpu_custom_call.1} parent=23 // pred_check_branch
          %179 = sbr.rel (%p177) target = $region32
        $region31: #{tpu_custom_call.1} parent=23 // pred_region
          %s181 = ssub.s32 16, 16
          %182 = vsyncadd %s174, %s181
          %s183 = sadd.s32 %s23, %s22
          %s184 = smul.addr %s183, 16
          %s185 = scalar_lea.hbm %s1, %s184
          %s187 = sshll.u32 %s176, 4
          %s188 = int_to_ptr.vmem [resolvable:$true] %s187
          %190 = dma.vmem_to_hbm [thread:$0]  %s188, 16, %s185, %s174
        $region32: #{tpu_custom_call.1} parent=23 // pred_fallthru
          _
      $region24: #{tpu_custom_call.1} parent=5 // pred_fallthru
        _
      %p191 = scmp.le.s32.totalorder 2, %s13
      // Predicated region
      $region33: #{tpu_custom_call.1} parent=5 // pred_check
        %p192 = pneg %p191
      $region34: #{tpu_custom_call.1} parent=5 // pred_check_branch
        %194 = sbr.rel (%p192) target = $region36
      $region35: #{tpu_custom_call.1} parent=5 // pred_region
        %s195 = ssub.s32 %s13, 2
        // Predicated region
        $region37: #{tpu_custom_call.1} parent=35 // pred_check
          %p196 = pneg %p84
        $region38: #{tpu_custom_call.1} parent=35 // pred_check_branch
          %198 = sbr.rel (%p196) target = $region40
        $region39: #{tpu_custom_call.1} parent=35 // pred_region
          %s199 = sand.u32 %s69, 1
          %s200 = scalar_lea.sflag [#allocation4], %s199
          %s201 = sand.u32 %s69, 1
          %s202 = scalar_lea.vmem [#allocation5], %s201
          %203 = dma.done %s200, 16
        $region40: #{tpu_custom_call.1} parent=35 // pred_fallthru
          _
      $region36: #{tpu_custom_call.1} parent=5 // pred_fallthru
        _
    $region6: #{tpu_custom_call.1} parent=1 // loop_footer
      %s17 = sadd.s32 1, %s13
    $region7: #{tpu_custom_call.1} parent=1 // loop_footer_branch
      %12 = sbr.rel target = $region3
    $region8: #{tpu_custom_call.1} parent=1 // loop_exit
      _
    %204 = vsyncpa [#allocation3], 1
    %s205 = scalar_lea.sflag [#allocation3], 1
    %206 = vsyncpa %s205, 1
    %207 = vsyncpa [#allocation4], 1
    %s208 = scalar_lea.sflag [#allocation4], 1
    %209 = vsyncpa %s208, 1

</llo_original>
